<compile_context>
chip_gen: v7x
topology: tpu7x:2x2x1
jax: 0.10.0
libtpu: 0.0.40
codegen_flags: <defaults>
</compile_context>

<pallas_src>
import functools
import math

import jax
import jax.numpy as jnp
from jax.experimental import pallas as pl
from jax.experimental.pallas import tpu as pltpu

_BIG_NEG = -1e30  # finite "minus infinity": padded vocab columns never win the
                  # max and their exp underflows to exactly 0.


def _round_up(x, m):
    return ((x + m - 1) // m) * m


def _vmem_limit_bytes():
    # Derive the VMEM budget from the actual part (v5e/v6e: 128 MiB physical,
    # v7x: 64 MiB) instead of a hard-coded "safe" constant; leave ~25% headroom
    # for Mosaic internal scratch and double-buffered blocks.
    try:
        cap = pltpu.get_tpu_info().vmem_capacity_bytes
    except Exception:  # query unavailable -> assume the smallest part (v7x)
        cap = 64 << 20
    return min(int(cap * 3 // 4), 96 << 20)


def _weight_spec(d_model, tv, n_buffers):
    index_map = lambda i, j: (0, j)
    if n_buffers > 2:
        # For small D the per-step matmul is short and double-buffering may not
        # hide the weight DMA; ask for a third buffer (one extra D*tv*2 B).
        try:
            return pl.BlockSpec((d_model, tv), index_map,
                                pipeline_mode=pl.Buffered(n_buffers))
        except TypeError:  # pipeline_mode unsupported -> default double buffer
            pass
    return pl.BlockSpec((d_model, tv), index_map)


def _logits_lse_kernel(x_ref, w_ref, b_ref, logits_ref, lse_ref, m_scr, l_scr):
    # Grid = (row tiles [parallel], vocab tiles [arbitrary / lse reduction]).
    # x_ref: (tm, D) bf16   w_ref: (D, tv) bf16   b_ref: (1, tv) f32
    # logits_ref: (tm, tv) streamed un-normalized logits (lane-dense stores).
    # lse_ref: (tm, 1) f32, resident across the vocab axis, written last step.
    # m_scr / l_scr: (tm, 1) f32 running max / running exp-sum.
    j = pl.program_id(1)

    @pl.when(j == 0)
    def _():
        m_scr[...] = jnp.full_like(m_scr, _BIG_NEG)
        l_scr[...] = jnp.zeros_like(l_scr)

    # bf16 x bf16 -> f32 accumulation on the MXU; bias + softmax math in f32.
    logits = (
        jnp.dot(x_ref[...], w_ref[...], preferred_element_type=jnp.float32)
        + b_ref[...]
    )
    logits_ref[...] = logits.astype(logits_ref.dtype)

    # Online logsumexp update across vocab tiles.
    m_prev = m_scr[...]
    m_new = jnp.maximum(m_prev, jnp.max(logits, axis=-1, keepdims=True))
    l_scr[...] = l_scr[...] * jnp.exp(m_prev - m_new) + jnp.sum(
        jnp.exp(logits - m_new), axis=-1, keepdims=True
    )
    m_scr[...] = m_new

    @pl.when(j == pl.num_programs(1) - 1)
    def _():
        lse_ref[...] = m_scr[...] + jnp.log(l_scr[...])


def _normalize_kernel(logits_ref, lse_ref, o_ref):
    # Streamed elementwise fixup: log_probs = logits - logsumexp(row).
    o_ref[...] = (
        logits_ref[...].astype(jnp.float32) - lse_ref[...]
    ).astype(o_ref.dtype)


def prepare_params(w, b, *, tv=1024):
    """One-time weight prep (do this at init, NOT per call).

    Casts w to bf16 and pads the vocab axis to a lane-dense tile multiple so
    the per-call path reads exactly what the kernel needs from HBM. Padded
    columns get a huge negative bias so they are excluded from the softmax.

    w: [D, V] f32, b: [V] f32 -> (w2: [D, v_pad] bf16, b2: [1, v_pad] f32).
    """
    d_model, vocab = w.shape
    tv_eff = min(tv, _round_up(vocab, 128))
    v_pad = _round_up(vocab, tv_eff)
    w2 = w.astype(jnp.bfloat16)
    b2 = b.reshape(1, vocab).astype(jnp.float32)
    if v_pad != vocab:
        w2 = jnp.pad(w2, ((0, 0), (0, v_pad - vocab)))
        b2 = jnp.pad(b2, ((0, 0), (0, v_pad - vocab)), constant_values=_BIG_NEG)
    return w2, b2


@functools.partial(
    jax.jit, static_argnames=("vocab_size", "tm", "tv", "out_dtype"))
def output_projection(x, w, b, *, vocab_size=None, tm=512, tv=1024,
                      out_dtype=jnp.float32):
    """log_softmax(x @ w + b, axis=-1).

    x: [B, S, D] f32.
    w: [D, v_pad] bf16 and b: [1, v_pad] f32 from prepare_params (bf16 matmul
       inputs with f32 accumulation is an explicit precision choice).
    vocab_size: true V (<= v_pad); defaults to v_pad.
    tm: row tile (512 amortizes weight HBM reads on v6e; auto-halved when the
        row grid would otherwise have a single tile, for v7x megacore balance).
    tv: vocab tile (multiple of 128 -> lane-dense, unmasked stores).
    out_dtype: jnp.float32 (default, matches torch) or jnp.bfloat16 to halve
        output HBM traffic.
    Returns [B, S, V] out_dtype.
    """
    B, S, D = x.shape
    v_pad = w.shape[1]
    V = v_pad if vocab_size is None else vocab_size
    M = B * S

    # Vocab tiling: lane-dense multiples of 128 dividing the padded width.
    tv_eff = min(tv, v_pad)
    assert v_pad % tv_eff == 0 and tv_eff % 128 == 0, (
        "w/b must come from prepare_params with a matching tv")
    # Every vocab tile must contain at least one real column, otherwise the
    # running max could stay at -1e30 and exp(m_prev - m_new) would overflow.
    assert v_pad - V < tv_eff, "fully-padded vocab tile"

    # Row tiling: multiples of 8 sublanes; large tm for weight reuse, but keep
    # at least 2 row tiles when possible so the 'parallel' axis can shard
    # across both v7x TensorCores.
    m_pad = _round_up(M, 8)
    tm_eff = _round_up(max(8, min(tm, m_pad)), 8)
    m_pad = _round_up(m_pad, tm_eff)
    if m_pad // tm_eff < 2 and tm_eff >= 16:
        tm_eff = _round_up(tm_eff // 2, 8)
        m_pad = _round_up(_round_up(M, 8), tm_eff)

    x2 = x.reshape(M, D).astype(jnp.bfloat16)
    if m_pad != M:
        x2 = jnp.pad(x2, ((0, m_pad - M), (0, 0)))

    grid = (m_pad // tm_eff, v_pad // tv_eff)
    n_wbuf = 3 if (D <= 1024 and grid[1] >= 3) else 2
    vmem_limit = _vmem_limit_bytes()

    # TODO(synk): if D grows beyond ~8k, add a K (d_model) reduction grid axis
    # with a (tm, tv) f32 accumulator so the x/w tiles stay bounded on v7x.
    logits, lse = pl.pallas_call(
        _logits_lse_kernel,
        out_shape=(
            jax.ShapeDtypeStruct((m_pad, v_pad), out_dtype),
            jax.ShapeDtypeStruct((m_pad, 1), jnp.float32),
        ),
        grid_spec=pltpu.PrefetchScalarGridSpec(
            num_scalar_prefetch=0,
            grid=grid,
            in_specs=[
                pl.BlockSpec((tm_eff, D), lambda i, j: (i, 0)),
                _weight_spec(D, tv_eff, n_wbuf),
                pl.BlockSpec((1, tv_eff), lambda i, j: (0, j)),
            ],
            out_specs=[
                pl.BlockSpec((tm_eff, tv_eff), lambda i, j: (i, j)),
                pl.BlockSpec((tm_eff, 1), lambda i, j: (i, 0)),
            ],
            scratch_shapes=[
                pltpu.VMEM((tm_eff, 1), jnp.float32),  # running max
                pltpu.VMEM((tm_eff, 1), jnp.float32),  # running exp-sum
            ],
        ),
        compiler_params=pltpu.CompilerParams(
            dimension_semantics=("parallel", "arbitrary"),
            vmem_limit_bytes=vmem_limit,
        ),
    )(x2, w, b)

    # Cheap streamed fixup pass; aliased in place onto the logits buffer.
    out = pl.pallas_call(
        _normalize_kernel,
        out_shape=jax.ShapeDtypeStruct((m_pad, v_pad), out_dtype),
        grid_spec=pltpu.PrefetchScalarGridSpec(
            num_scalar_prefetch=0,
            grid=grid,
            in_specs=[
                pl.BlockSpec((tm_eff, tv_eff), lambda i, j: (i, j)),
                pl.BlockSpec((tm_eff, 1), lambda i, j: (i, 0)),
            ],
            out_specs=pl.BlockSpec((tm_eff, tv_eff), lambda i, j: (i, j)),
        ),
        compiler_params=pltpu.CompilerParams(
            dimension_semantics=("parallel", "parallel"),
            vmem_limit_bytes=vmem_limit,
        ),
        input_output_aliases={0: 0},
    )(logits, lse)

    # Only pay for a slice copy if padding was actually added.
    if m_pad != M or v_pad != V:
        out = out[:M, :V]
    return out.reshape(B, S, V)


def init_params(key, d_model, vocab_size):
    # Deterministic init mimicking nn.Linear's uniform(-1/sqrt(fan_in), 1/sqrt(fan_in)).
    kw, kb = jax.random.split(key)
    bound = 1.0 / math.sqrt(d_model)
    w = jax.random.uniform(
        kw, (d_model, vocab_size), jnp.float32, minval=-bound, maxval=bound
    )
    b = jax.random.uniform(
        kb, (vocab_size,), jnp.float32, minval=-bound, maxval=bound
    )
    return w, b


if __name__ == "__main__":
    key = jax.random.PRNGKey(0)
    kx, kp = jax.random.split(key)

    batch, seq, d_model, vocab = 2, 8, 32, 128
    x = jax.random.normal(kx, (batch, seq, d_model), jnp.float32)
    w, b = init_params(kp, d_model, vocab)

    # One-time weight prep (bf16 cast + vocab padding) outside the call path.
    w2, b2 = prepare_params(w, b)

    out = output_projection(x, w2, b2, vocab_size=vocab)
    out = jax.block_until_ready(out)

    # Reference with the same bf16 input rounding the kernel uses (f32 accum).
    xb = x.astype(jnp.bfloat16).astype(jnp.float32)
    wb = w.astype(jnp.bfloat16).astype(jnp.float32)
    ref = jax.nn.log_softmax(jnp.einsum("bsd,dv->bsv", xb, wb) + b, axis=-1)

    assert out.shape == (batch, seq, vocab)
    assert jnp.allclose(out, ref, atol=2e-3, rtol=2e-3), "mismatch vs reference"

    print("KERNEL_OK")
</pallas_src>

<mosaic_0001>
module attributes {stable_mosaic.version = 11 : i64} {
  func.func @_normalize_kernel(%arg0: i32, %arg1: i32, %arg2: memref<8x128xf32, #tpu.memory_space<vmem>>, %arg3: memref<8x1xf32, #tpu.memory_space<vmem>>, %arg4: memref<8x128xf32, #tpu.memory_space<vmem>>) attributes {dimension_semantics = [#tpu.dimension_semantics<parallel>, #tpu.dimension_semantics<parallel>], iteration_bounds = array<i64: 2, 1>, scalar_prefetch = 0 : i64, scratch_operands = 0 : i64, tpu.core_type = #tpu.core_type<tc>, window_params = [{transform_indices = @transform_0, window_bounds = array<i64: 8, 128>}, {transform_indices = @transform_1, window_bounds = array<i64: 8, 1>}, {transform_indices = @transform_2, window_bounds = array<i64: 8, 128>}]} {
    %c0 = arith.constant 0 : index
    %c0_0 = arith.constant 0 : index
    %0 = vector.load %arg2[%c0, %c0_0] : memref<8x128xf32, #tpu.memory_space<vmem>>, vector<8x128xf32>
    %c0_1 = arith.constant 0 : index
    %c0_2 = arith.constant 0 : index
    %1 = vector.load %arg3[%c0_1, %c0_2] : memref<8x1xf32, #tpu.memory_space<vmem>>, vector<8x1xf32>
    %2 = vector.broadcast %1 : vector<8x1xf32> to vector<8x128xf32>
    %3 = arith.subf %0, %2 : vector<8x128xf32>
    %c0_3 = arith.constant 0 : index
    %c0_4 = arith.constant 0 : index
    %4 = vector.load %arg4[%c0_3, %c0_4] : memref<8x128xf32, #tpu.memory_space<vmem>>, vector<8x128xf32>
    tpu.vector_store %arg4[%c0_3, %c0_4], %3 {strides = array<i32>} : memref<8x128xf32, #tpu.memory_space<vmem>>, vector<8x128xf32>,
    return
  }
  func.func @transform_0(%arg0: i32, %arg1: i32) -> (i32, i32) {
    %c0_i32 = arith.constant 0 : i32
    return %arg0, %arg1 : i32, i32
  }
  func.func @transform_1(%arg0: i32, %arg1: i32) -> (i32, i32) {
    %c0_i32 = arith.constant 0 : i32
    %c0_i32_0 = arith.constant 0 : i32
    return %arg0, %c0_i32 : i32, i32
  }
  func.func @transform_2(%arg0: i32, %arg1: i32) -> (i32, i32) {
    %c0_i32 = arith.constant 0 : i32
    return %arg0, %arg1 : i32, i32
  }
}

module attributes {stable_mosaic.version = 11 : i64} {
  func.func @_logits_lse_kernel(%arg0: i32, %arg1: i32, %arg2: memref<8x32xbf16, #tpu.memory_space<vmem>>, %arg3: memref<32x128xbf16, #tpu.memory_space<vmem>>, %arg4: memref<1x128xf32, #tpu.memory_space<vmem>>, %arg5: memref<8x128xf32, #tpu.memory_space<vmem>>, %arg6: memref<8x1xf32, #tpu.memory_space<vmem>>, %arg7: memref<8x1xf32, #tpu.memory_space<vmem>>, %arg8: memref<8x1xf32, #tpu.memory_space<vmem>>) attributes {dimension_semantics = [#tpu.dimension_semantics<parallel>, #tpu.dimension_semantics<arbitrary>], iteration_bounds = array<i64: 2, 1>, scalar_prefetch = 0 : i64, scratch_operands = 2 : i64, tpu.core_type = #tpu.core_type<tc>, window_params = [{transform_indices = @transform_0, window_bounds = array<i64: 8, 32>}, {transform_indices = @transform_1, window_bounds = array<i64: 32, 128>}, {transform_indices = @transform_2, window_bounds = array<i64: 1, 128>}, {transform_indices = @transform_3, window_bounds = array<i64: 8, 128>}, {transform_indices = @transform_4, window_bounds = array<i64: 8, 1>}]} {
    %c0_i32 = arith.constant 0 : i32
    %0 = arith.cmpi eq, %arg1, %c0_i32 : i32
    %1 = arith.extui %0 : i1 to i32
    %c0_i32_0 = arith.constant 0 : i32
    %2 = arith.cmpi ne, %1, %c0_i32_0 : i32
    scf.if %2 {
      %cst_20 = arith.constant -1.000000e+30 : f32
      %29 = vector.broadcast %cst_20 : f32 to vector<8x1xf32>
      %c0_21 = arith.constant 0 : index
      %c0_22 = arith.constant 0 : index
      %30 = vector.load %arg7[%c0_21, %c0_22] : memref<8x1xf32, #tpu.memory_space<vmem>>, vector<8x1xf32>
      tpu.vector_store %arg7[%c0_21, %c0_22], %29 {strides = array<i32>} : memref<8x1xf32, #tpu.memory_space<vmem>>, vector<8x1xf32>,
      %cst_23 = arith.constant 0.000000e+00 : f32
      %31 = vector.broadcast %cst_23 : f32 to vector<8x1xf32>
      %c0_24 = arith.constant 0 : index
      %c0_25 = arith.constant 0 : index
      %32 = vector.load %arg8[%c0_24, %c0_25] : memref<8x1xf32, #tpu.memory_space<vmem>>, vector<8x1xf32>
      tpu.vector_store %arg8[%c0_24, %c0_25], %31 {strides = array<i32>} : memref<8x1xf32, #tpu.memory_space<vmem>>, vector<8x1xf32>,
    } else {
    }
    %c0 = arith.constant 0 : index
    %c0_1 = arith.constant 0 : index
    %3 = vector.load %arg2[%c0, %c0_1] : memref<8x32xbf16, #tpu.memory_space<vmem>>, vector<8x32xbf16>
    %c0_2 = arith.constant 0 : index
    %c0_3 = arith.constant 0 : index
    %4 = vector.load %arg3[%c0_2, %c0_3] : memref<32x128xbf16, #tpu.memory_space<vmem>>, vector<32x128xbf16>
    %cst = arith.constant dense<0.000000e+00> : vector<8x128xf32>
    %5 = tpu.matmul %3, %4, %cst {dimension_numbers = #tpu.dot_dimension_numbers<[1], [0], [0], [1], [0, 0, 1, 1], [], []>} : vector<8x32xbf16>, vector<32x128xbf16>, vector<8x128xf32> -> vector<8x128xf32>
    %c0_4 = arith.constant 0 : index
    %c0_5 = arith.constant 0 : index
    %6 = vector.load %arg4[%c0_4, %c0_5] : memref<1x128xf32, #tpu.memory_space<vmem>>, vector<1x128xf32>
    %7 = vector.broadcast %6 : vector<1x128xf32> to vector<8x128xf32>
    %8 = arith.addf %5, %7 : vector<8x128xf32>
    %c0_6 = arith.constant 0 : index
    %c0_7 = arith.constant 0 : index
    %9 = vector.load %arg5[%c0_6, %c0_7] : memref<8x128xf32, #tpu.memory_space<vmem>>, vector<8x128xf32>
    tpu.vector_store %arg5[%c0_6, %c0_7], %8 {strides = array<i32>} : memref<8x128xf32, #tpu.memory_space<vmem>>, vector<8x128xf32>,
    %c0_8 = arith.constant 0 : index
    %c0_9 = arith.constant 0 : index
    %10 = vector.load %arg7[%c0_8, %c0_9] : memref<8x1xf32, #tpu.memory_space<vmem>>, vector<8x1xf32>
    %cst_10 = arith.constant dense<0xFF800000> : vector<8xf32>
    %11 = vector.multi_reduction <maximumf>, %8, %cst_10 [1] : vector<8x128xf32> to vector<8xf32>
    %12 = vector.shape_cast %11 : vector<8xf32> to vector<8x1xf32>
    %13 = arith.maximumf %10, %12 : vector<8x1xf32>
    %c0_11 = arith.constant 0 : index
    %c0_12 = arith.constant 0 : index
    %14 = vector.load %arg8[%c0_11, %c0_12] : memref<8x1xf32, #tpu.memory_space<vmem>>, vector<8x1xf32>
    %15 = arith.subf %10, %13 : vector<8x1xf32>
    %16 = math.exp %15 : vector<8x1xf32>
    %17 = arith.mulf %14, %16 : vector<8x1xf32>
    %18 = vector.broadcast %13 : vector<8x1xf32> to vector<8x128xf32>
    %19 = arith.subf %8, %18 : vector<8x128xf32>
    %20 = math.exp %19 : vector<8x128xf32>
    %cst_13 = arith.constant dense<0.000000e+00> : vector<8xf32>
    %21 = vector.multi_reduction <add>, %20, %cst_13 [1] : vector<8x128xf32> to vector<8xf32>
    %22 = vector.shape_cast %21 : vector<8xf32> to vector<8x1xf32>
    %23 = arith.addf %17, %22 : vector<8x1xf32>
    %c0_14 = arith.constant 0 : index
    %c0_15 = arith.constant 0 : index
    %24 = vector.load %arg8[%c0_14, %c0_15] : memref<8x1xf32, #tpu.memory_space<vmem>>, vector<8x1xf32>
    tpu.vector_store %arg8[%c0_14, %c0_15], %23 {strides = array<i32>} : memref<8x1xf32, #tpu.memory_space<vmem>>, vector<8x1xf32>,
    %c0_16 = arith.constant 0 : index
    %c0_17 = arith.constant 0 : index
    %25 = vector.load %arg7[%c0_16, %c0_17] : memref<8x1xf32, #tpu.memory_space<vmem>>, vector<8x1xf32>
    tpu.vector_store %arg7[%c0_16, %c0_17], %13 {strides = array<i32>} : memref<8x1xf32, #tpu.memory_space<vmem>>, vector<8x1xf32>,
    %c0_i32_18 = arith.constant 0 : i32
    %26 = arith.cmpi eq, %arg1, %c0_i32_18 : i32
    %27 = arith.extui %26 : i1 to i32
    %c0_i32_19 = arith.constant 0 : i32
    %28 = arith.cmpi ne, %27, %c0_i32_19 : i32
    scf.if %28 {
      %c0_20 = arith.constant 0 : index
      %c0_21 = arith.constant 0 : index
      %29 = vector.load %arg7[%c0_20, %c0_21] : memref<8x1xf32, #tpu.memory_space<vmem>>, vector<8x1xf32>
      %c0_22 = arith.constant 0 : index
      %c0_23 = arith.constant 0 : index
      %30 = vector.load %arg8[%c0_22, %c0_23] : memref<8x1xf32, #tpu.memory_space<vmem>>, vector<8x1xf32>
      %31 = math.log %30 : vector<8x1xf32>
      %32 = arith.addf %29, %31 : vector<8x1xf32>
      %c0_24 = arith.constant 0 : index
      %c0_25 = arith.constant 0 : index
      %33 = vector.load %arg6[%c0_24, %c0_25] : memref<8x1xf32, #tpu.memory_space<vmem>>, vector<8x1xf32>
      tpu.vector_store %arg6[%c0_24, %c0_25], %32 {strides = array<i32>} : memref<8x1xf32, #tpu.memory_space<vmem>>, vector<8x1xf32>,
    } else {
    }
    return
  }
  func.func @transform_0(%arg0: i32, %arg1: i32) -> (i32, i32) {
    %c0_i32 = arith.constant 0 : i32
    %c0_i32_0 = arith.constant 0 : i32
    return %arg0, %c0_i32 : i32, i32
  }
  func.func @transform_1(%arg0: i32, %arg1: i32) -> (i32, i32) {
    %c0_i32 = arith.constant 0 : i32
    %c0_i32_0 = arith.constant 0 : i32
    return %c0_i32, %arg1 : i32, i32
  }
  func.func @transform_2(%arg0: i32, %arg1: i32) -> (i32, i32) {
    %c0_i32 = arith.constant 0 : i32
    %c0_i32_0 = arith.constant 0 : i32
    return %c0_i32, %arg1 : i32, i32
  }
  func.func @transform_3(%arg0: i32, %arg1: i32) -> (i32, i32) {
    %c0_i32 = arith.constant 0 : i32
    return %arg0, %arg1 : i32, i32
  }
  func.func @transform_4(%arg0: i32, %arg1: i32) -> (i32, i32) {
    %c0_i32 = arith.constant 0 : i32
    %c0_i32_0 = arith.constant 0 : i32
    return %arg0, %c0_i32 : i32, i32
  }
}

</mosaic_0001>

<llo_original>
// kernel: output_projection.3
$region0: #{output_projection.3}
  #allocation0 [shape = 'u32[]', space=smem, size = 0x4, offset = 0x4, fixed_abs, tag = 'smem constant byte address 0x4 - core index']
  #allocation1 [shape = 'u32[144,128]{1,0:T(1,128)}', space=vmem, size = 0x12000, scoped, tag = 'internal scratch']
  %s0 = inlined_call_operand.vmem [shape: f32[16,128], index: 0, kind: input, shape index: {}, may-alias: {0,2}]
  %s1 = inlined_call_operand.vmem [shape: f32[16,1], index: 1, kind: input, shape index: {}]
  %s2 = inlined_call_operand.vmem [shape: f32[16,128], index: 2, kind: output, shape index: {}, may-alias: {0,2}]
  %s3 = sld [smem:[#allocation0]]
  $region41: #{output_projection.3} parent=0
    _
  %s5 = ssub.s32 1, %s3
  %s6 = scalar_select 0, %s5, %s3
  loop: start=0, step=1, limit=4
  $region2: #{output_projection.3} parent=0 // loop_pre_header
    _
  $region3: #{output_projection.3} parent=0 // loop_header
    %s8 = sphi 0, %s12
    %p9 = scmp.ge.s32.totalorder %s8, 4
    %s15 = sphi 0, %s27
    %s16 = sphi 0, %s23
    %s17 = sphi 0, %s15
    %s18 = sphi 0, %s16
    %s19 = sphi 0, %s17
    %s20 = sphi 0, %s18
    %s32 = sphi 0, %s34
    %s35 = sphi 0, %s32
    %s36 = sphi 0, %s35
    %s52 = sphi 0, %s36
    %s58 = sphi 0, %s60
    %s61 = sphi 0, %s58
    %s62 = sphi 0, %s61
    %s78 = sphi 0, %s62
    %s86 = sphi 0, %s88
    %s89 = sphi 0, %s86
    %s90 = sphi 0, %s89
    %s106 = sphi 0, %s90
  $region4: #{output_projection.3} parent=0 // loop_header_branch
    %11 = sbr.rel (%p9) target = $region8
  $region5: #{output_projection.3} parent=0 // loop_body
    %s13 = ssub.s32 %s8, 1
    %s14 = ssub.s32 %s8, 2
    %s21 = sadd.s32 1, %s16
    %p22 = scmp.ge.s32.totalorder %s21, 1
    %s23 = scalar_select %p22, 0, %s21
    %s24 = sadd.s32 1, %s15
    %s25 = scalar_select %p22, %s24, %s15
    %p26 = scmp.ge.s32.totalorder %s25, 2
    %s27 = scalar_select %p26, 0, %s25
    %s28 = ssub.s32 %s15, %s27
    %s29 = ssub.s32 %s16, %s23
    %s30 = sor.u32 %s28, %s29
    %p31 = scmp.eq.s32.totalorder %s30, 0
    %s33 = sadd.s32 %s32, 1
    %s34 = scalar_select %p31, %s32, %s33
    %p37 = pneg %p31
    %p38 = scmp.eq.s32.totalorder %s8, 1
    %p39 = por %p37, %p38
    %p40 = scmp.ne.s32.totalorder %s32, %s35
    %p41 = scmp.eq.s32.totalorder %s8, 0
    %p42 = por %p40, %p41
    %p43 = scmp.ne.s32.totalorder %s32, %s35
    %p44 = scmp.eq.s32.totalorder %s13, 1
    %p45 = por %p43, %p44
    %p46 = scmp.ne.s32.totalorder %s35, %s36
    %p47 = scmp.eq.s32.totalorder %s13, 0
    %p48 = por %p46, %p47
    %p49 = scmp.ne.s32.totalorder %s35, %s36
    %p50 = scmp.eq.s32.totalorder %s14, 1
    %p51 = por %p49, %p50
    %p53 = scmp.ne.s32.totalorder %s36, %s52
    %p54 = scmp.eq.s32.totalorder %s14, 0
    %p55 = por %p53, %p54
    %s56 = ssub.s32 %s15, %s27
    %p57 = scmp.eq.s32.totalorder %s56, 0
    %s59 = sadd.s32 %s58, 1
    %s60 = scalar_select %p57, %s58, %s59
    %p63 = pneg %p57
    %p64 = scmp.eq.s32.totalorder %s8, 1
    %p65 = por %p63, %p64
    %p66 = scmp.ne.s32.totalorder %s58, %s61
    %p67 = scmp.eq.s32.totalorder %s8, 0
    %p68 = por %p66, %p67
    %p69 = scmp.ne.s32.totalorder %s58, %s61
    %p70 = scmp.eq.s32.totalorder %s13, 1
    %p71 = por %p69, %p70
    %p72 = scmp.ne.s32.totalorder %s61, %s62
    %p73 = scmp.eq.s32.totalorder %s13, 0
    %p74 = por %p72, %p73
    %p75 = scmp.ne.s32.totalorder %s61, %s62
    %p76 = scmp.eq.s32.totalorder %s14, 1
    %p77 = por %p75, %p76
    %p79 = scmp.ne.s32.totalorder %s62, %s78
    %p80 = scmp.eq.s32.totalorder %s14, 0
    %p81 = por %p79, %p80
    %s82 = ssub.s32 %s15, %s27
    %s83 = ssub.s32 %s16, %s23
    %s84 = sor.u32 %s82, %s83
    %p85 = scmp.eq.s32.totalorder %s84, 0
    %s87 = sadd.s32 %s86, 1
    %s88 = scalar_select %p85, %s86, %s87
    %p91 = pneg %p85
    %p92 = scmp.eq.s32.totalorder %s8, 1
    %p93 = por %p91, %p92
    %p94 = scmp.ne.s32.totalorder %s86, %s89
    %p95 = scmp.eq.s32.totalorder %s8, 0
    %p96 = por %p94, %p95
    %p97 = scmp.ne.s32.totalorder %s86, %s89
    %p98 = scmp.eq.s32.totalorder %s13, 1
    %p99 = por %p97, %p98
    %p100 = scmp.ne.s32.totalorder %s89, %s90
    %p101 = scmp.eq.s32.totalorder %s13, 0
    %p102 = por %p100, %p101
    %p103 = scmp.ne.s32.totalorder %s89, %s90
    %p104 = scmp.eq.s32.totalorder %s14, 1
    %p105 = por %p103, %p104
    %p107 = scmp.ne.s32.totalorder %s90, %s106
    %p108 = scmp.eq.s32.totalorder %s14, 0
    %p109 = por %p107, %p108
    %p110 = scmp.le.s32.totalorder 1, %s8
    %p111 = scmp.lt.s32.totalorder %s8, 3
    %p112 = pnand %p110, %p111
    %p113 = pneg %p112
    // Predicated region
    $region9: #{output_projection.3} parent=5 // pred_check
      _
    $region10: #{output_projection.3} parent=5 // pred_check_branch
      %115 = sbr.rel (%p112) target = $region12
    $region11: #{output_projection.3} parent=5 // pred_region
      %s116 = ssub.s32 %s8, 1
    $region12: #{output_projection.3} parent=5 // pred_fallthru
      _
    %p117 = scmp.lt.s32.totalorder %s8, 2
    // Predicated region
    $region13: #{output_projection.3} parent=5 // pred_check
      %p118 = pneg %p117
    $region14: #{output_projection.3} parent=5 // pred_check_branch
      %120 = sbr.rel (%p118) target = $region16
    $region15: #{output_projection.3} parent=5 // pred_region
      // Predicated region
      $region17: #{output_projection.3} parent=15 // pred_check
        %p121 = pneg %p42
      $region18: #{output_projection.3} parent=15 // pred_check_branch
        %123 = sbr.rel (%p121) target = $region20
      $region19: #{output_projection.3} parent=15 // pred_region
        %p124 = scmp.lt.s32.totalorder %s15, 1
        %s125 = scalar_select %p124, %s15, 1
        %p126 = scmp.lt.s32.totalorder %s16, 0
        %s127 = scalar_select %p126, %s16, 0
        %s128 = sadd.s32 %s127, %s125
        %s129 = smul.addr %s128, 8
        %s130 = scalar_lea.vmem %s0, %s129
      $region20: #{output_projection.3} parent=15 // pred_fallthru
        _
      // Predicated region
      $region21: #{output_projection.3} parent=15 // pred_check
        %p131 = pneg %p68
      $region22: #{output_projection.3} parent=15 // pred_check_branch
        %133 = sbr.rel (%p131) target = $region24
      $region23: #{output_projection.3} parent=15 // pred_region
        %p134 = scmp.lt.s32.totalorder %s15, 1
        %s135 = scalar_select %p134, %s15, 1
        %s136 = smul.addr %s135, 8
        %s137 = scalar_lea.vmem %s1, %s136
      $region24: #{output_projection.3} parent=15 // pred_fallthru
        _
    $region16: #{output_projection.3} parent=5 // pred_fallthru
      _
    %p138 = scmp.le.s32.totalorder 1, %s8
    %p139 = scmp.lt.s32.totalorder %s8, 3
    %p140 = pnand %p138, %p139
    %p141 = pneg %p140
    // Predicated region
    $region25: #{output_projection.3} parent=5 // pred_check
      _
    $region26: #{output_projection.3} parent=5 // pred_check_branch
      %143 = sbr.rel (%p140) target = $region28
    $region27: #{output_projection.3} parent=5 // pred_region
      %s144 = ssub.s32 %s8, 1
      %p145 = scmp.lt.s32.totalorder %s17, 1
      %s146 = scalar_select %p145, %s17, 1
      %p147 = scmp.lt.s32.totalorder %s18, 0
      %s148 = scalar_select %p147, %s18, 0
      %s149 = sadd.s32 %s148, %s146
      %s150 = smul.addr %s149, 8
      %s151 = scalar_lea.vmem %s0, %s150
      %p152 = pneg %p48
      %p153 = pneg %p45
      %p154 = scmp.lt.s32.totalorder %s17, 1
      %s155 = scalar_select %p154, %s17, 1
      %s156 = smul.addr %s155, 8
      %s157 = scalar_lea.vmem %s1, %s156
      %p158 = pneg %p74
      %p159 = pneg %p71
      %p160 = pneg %p102
      %p161 = pneg %p99
      %p162 = scmp.lt.s32.totalorder %s17, 1
      %s163 = scalar_select %p162, %s17, 1
      %p164 = scmp.lt.s32.totalorder %s18, 0
      %s165 = scalar_select %p164, %s18, 0
      %s166 = sadd.s32 %s165, %s163
      %s167 = smul.addr %s166, 8
      %s168 = scalar_lea.vmem %s2, %s167
      %p169 = scmp.lt.s32.totalorder %s17, 1
      %s170 = scalar_select %p169, %s17, 1
      %p171 = scmp.lt.s32.totalorder %s18, 0
      %s172 = scalar_select %p171, %s18, 0
      %s173 = sadd.s32 %s172, %s170
      %s174 = smul.addr %s173, 8
      %s175 = scalar_lea.vmem %s0, %s174
      %p176 = scmp.lt.s32.totalorder %s17, 1
      %s177 = scalar_select %p176, %s17, 1
      %s178 = smul.addr %s177, 8
      %s179 = scalar_lea.vmem %s1, %s178
      %p180 = scmp.lt.s32.totalorder %s17, 1
      %s181 = scalar_select %p180, %s17, 1
      %p182 = scmp.lt.s32.totalorder %s18, 0
      %s183 = scalar_select %p182, %s18, 0
      %s184 = sadd.s32 %s183, %s181
      %s185 = smul.addr %s184, 8
      %s186 = scalar_lea.vmem %s2, %s185
      %v187 = vld [vmem:[%s175] sm:$0xff]
      %v188 = vld [vmem:[%s179] sm:$0xff]
      %190 = vset.pattern.permute.xlu0 0
      %191 = vperm.xlu0 %190, %v188
      %v192 = vpop.permute.xlu0 %191
      %v194 = vsub.f32 %v187, %v192
      %195 = vst [vmem:[%s186] sm:$0xff] %v194
      %p196 = scmp.lt.s32.totalorder %s17, 1
      %s197 = scalar_select %p196, %s17, 1
      %p198 = scmp.lt.s32.totalorder %s18, 0
      %s199 = scalar_select %p198, %s18, 0
      %s200 = sadd.s32 %s199, %s197
      %s201 = smul.addr %s200, 8
      %s202 = scalar_lea.vmem %s2, %s201
      // Predicated region
      $region29: #{output_projection.3} parent=27 // pred_check
        %p203 = pneg %p99
      $region30: #{output_projection.3} parent=27 // pred_check_branch
        %205 = sbr.rel (%p203) target = $region32
      $region31: #{output_projection.3} parent=27 // pred_region
        _
      $region32: #{output_projection.3} parent=27 // pred_fallthru
        _
    $region28: #{output_projection.3} parent=5 // pred_fallthru
      _
    %p206 = scmp.le.s32.totalorder 2, %s8
    // Predicated region
    $region33: #{output_projection.3} parent=5 // pred_check
      %p207 = pneg %p206
    $region34: #{output_projection.3} parent=5 // pred_check_branch
      %209 = sbr.rel (%p207) target = $region36
    $region35: #{output_projection.3} parent=5 // pred_region
      %s210 = ssub.s32 %s8, 2
      // Predicated region
      $region37: #{output_projection.3} parent=35 // pred_check
        %p211 = pneg %p105
      $region38: #{output_projection.3} parent=35 // pred_check_branch
        %213 = sbr.rel (%p211) target = $region40
      $region39: #{output_projection.3} parent=35 // pred_region
        %p214 = scmp.lt.s32.totalorder %s19, 1
        %s215 = scalar_select %p214, %s19, 1
        %p216 = scmp.lt.s32.totalorder %s20, 0
        %s217 = scalar_select %p216, %s20, 0
        %s218 = sadd.s32 %s217, %s215
        %s219 = smul.addr %s218, 8
        %s220 = scalar_lea.vmem %s2, %s219
      $region40: #{output_projection.3} parent=35 // pred_fallthru
        _
    $region36: #{output_projection.3} parent=5 // pred_fallthru
      _
  $region6: #{output_projection.3} parent=0 // loop_footer
    %s12 = sadd.s32 1, %s8
  $region7: #{output_projection.3} parent=0 // loop_footer_branch
    %7 = sbr.rel target = $region3
  $region8: #{output_projection.3} parent=0 // loop_exit
    _

// kernel: output_projection.2
$region0: #{output_projection.2}
  #allocation0 [shape = 'u32[]', space=smem, size = 0x4, offset = 0x4, fixed_abs, tag = 'smem constant byte address 0x4 - core index']
  #allocation1 [shape = 'u32[144,128]{1,0:T(1,128)}', space=vmem, size = 0x12000, scoped, tag = 'internal scratch']
  #allocation2 [shape = 'f32[8,1]{1,0:T(8,128)}', space=vmem, size = 0x1000, scoped, tag = 'scratch operand']
  #allocation3 [shape = 'f32[8,1]{1,0:T(8,128)}', space=vmem, size = 0x1000, scoped, tag = 'scratch operand']
  %s0 = inlined_call_operand.vmem [shape: bf16[16,32], index: 0, kind: input, shape index: {}]
  %s1 = inlined_call_operand.vmem [shape: bf16[32,128], index: 1, kind: input, shape index: {}]
  %s2 = inlined_call_operand.vmem [shape: f32[1,128], index: 2, kind: input, shape index: {}]
  %s3 = inlined_call_operand.vmem [shape: f32[16,128], index: 3, kind: output, shape index: {0}]
  %s4 = inlined_call_operand.vmem [shape: f32[16,1], index: 4, kind: output, shape index: {1}]
  %5 = xla_tuple %s3, %s4
  %s6 = sld [smem:[#allocation0]]
  $region61: #{output_projection.2} parent=0
    _
  %s8 = ssub.s32 1, %s6
  %s9 = scalar_select 0, %s8, %s6
  loop: start=0, step=1, limit=4
  $region2: #{output_projection.2} parent=0 // loop_pre_header
    _
  $region3: #{output_projection.2} parent=0 // loop_header
    %s11 = sphi 0, %s15
    %p12 = scmp.ge.s32.totalorder %s11, 4
    %s18 = sphi 0, %s30
    %s19 = sphi 0, %s26
    %s20 = sphi 0, %s18
    %s21 = sphi 0, %s19
    %s22 = sphi 0, %s20
    %s23 = sphi 0, %s21
    %s33 = sphi 0, %s35
    %s36 = sphi 0, %s33
    %s37 = sphi 0, %s36
    %s53 = sphi 0, %s37
    %s59 = sphi 0, %s61
    %s62 = sphi 0, %s59
    %s63 = sphi 0, %s62
    %s79 = sphi 0, %s63
    %s85 = sphi 0, %s87
    %s88 = sphi 0, %s85
    %s89 = sphi 0, %s88
    %s105 = sphi 0, %s89
    %s113 = sphi 0, %s115
    %s116 = sphi 0, %s113
    %s117 = sphi 0, %s116
    %s133 = sphi 0, %s117
    %s139 = sphi 0, %s141
    %s142 = sphi 0, %s139
    %s143 = sphi 0, %s142
    %s159 = sphi 0, %s143
  $region4: #{output_projection.2} parent=0 // loop_header_branch
    %14 = sbr.rel (%p12) target = $region8
  $region5: #{output_projection.2} parent=0 // loop_body
    %s16 = ssub.s32 %s11, 1
    %s17 = ssub.s32 %s11, 2
    %s24 = sadd.s32 1, %s19
    %p25 = scmp.ge.s32.totalorder %s24, 1
    %s26 = scalar_select %p25, 0, %s24
    %s27 = sadd.s32 1, %s18
    %s28 = scalar_select %p25, %s27, %s18
    %p29 = scmp.ge.s32.totalorder %s28, 2
    %s30 = scalar_select %p29, 0, %s28
    %s31 = ssub.s32 %s18, %s30
    %p32 = scmp.eq.s32.totalorder %s31, 0
    %s34 = sadd.s32 %s33, 1
    %s35 = scalar_select %p32, %s33, %s34
    %p38 = pneg %p32
    %p39 = scmp.eq.s32.totalorder %s11, 1
    %p40 = por %p38, %p39
    %p41 = scmp.ne.s32.totalorder %s33, %s36
    %p42 = scmp.eq.s32.totalorder %s11, 0
    %p43 = por %p41, %p42
    %p44 = scmp.ne.s32.totalorder %s33, %s36
    %p45 = scmp.eq.s32.totalorder %s16, 1
    %p46 = por %p44, %p45
    %p47 = scmp.ne.s32.totalorder %s36, %s37
    %p48 = scmp.eq.s32.totalorder %s16, 0
    %p49 = por %p47, %p48
    %p50 = scmp.ne.s32.totalorder %s36, %s37
    %p51 = scmp.eq.s32.totalorder %s17, 1
    %p52 = por %p50, %p51
    %p54 = scmp.ne.s32.totalorder %s37, %s53
    %p55 = scmp.eq.s32.totalorder %s17, 0
    %p56 = por %p54, %p55
    %s57 = ssub.s32 %s19, %s26
    %p58 = scmp.eq.s32.totalorder %s57, 0
    %s60 = sadd.s32 %s59, 1
    %s61 = scalar_select %p58, %s59, %s60
    %p64 = pneg %p58
    %p65 = scmp.eq.s32.totalorder %s11, 1
    %p66 = por %p64, %p65
    %p67 = scmp.ne.s32.totalorder %s59, %s62
    %p68 = scmp.eq.s32.totalorder %s11, 0
    %p69 = por %p67, %p68
    %p70 = scmp.ne.s32.totalorder %s59, %s62
    %p71 = scmp.eq.s32.totalorder %s16, 1
    %p72 = por %p70, %p71
    %p73 = scmp.ne.s32.totalorder %s62, %s63
    %p74 = scmp.eq.s32.totalorder %s16, 0
    %p75 = por %p73, %p74
    %p76 = scmp.ne.s32.totalorder %s62, %s63
    %p77 = scmp.eq.s32.totalorder %s17, 1
    %p78 = por %p76, %p77
    %p80 = scmp.ne.s32.totalorder %s63, %s79
    %p81 = scmp.eq.s32.totalorder %s17, 0
    %p82 = por %p80, %p81
    %s83 = ssub.s32 %s19, %s26
    %p84 = scmp.eq.s32.totalorder %s83, 0
    %s86 = sadd.s32 %s85, 1
    %s87 = scalar_select %p84, %s85, %s86
    %p90 = pneg %p84
    %p91 = scmp.eq.s32.totalorder %s11, 1
    %p92 = por %p90, %p91
    %p93 = scmp.ne.s32.totalorder %s85, %s88
    %p94 = scmp.eq.s32.totalorder %s11, 0
    %p95 = por %p93, %p94
    %p96 = scmp.ne.s32.totalorder %s85, %s88
    %p97 = scmp.eq.s32.totalorder %s16, 1
    %p98 = por %p96, %p97
    %p99 = scmp.ne.s32.totalorder %s88, %s89
    %p100 = scmp.eq.s32.totalorder %s16, 0
    %p101 = por %p99, %p100
    %p102 = scmp.ne.s32.totalorder %s88, %s89
    %p103 = scmp.eq.s32.totalorder %s17, 1
    %p104 = por %p102, %p103
    %p106 = scmp.ne.s32.totalorder %s89, %s105
    %p107 = scmp.eq.s32.totalorder %s17, 0
    %p108 = por %p106, %p107
    %s109 = ssub.s32 %s18, %s30
    %s110 = ssub.s32 %s19, %s26
    %s111 = sor.u32 %s109, %s110
    %p112 = scmp.eq.s32.totalorder %s111, 0
    %s114 = sadd.s32 %s113, 1
    %s115 = scalar_select %p112, %s113, %s114
    %p118 = pneg %p112
    %p119 = scmp.eq.s32.totalorder %s11, 1
    %p120 = por %p118, %p119
    %p121 = scmp.ne.s32.totalorder %s113, %s116
    %p122 = scmp.eq.s32.totalorder %s11, 0
    %p123 = por %p121, %p122
    %p124 = scmp.ne.s32.totalorder %s113, %s116
    %p125 = scmp.eq.s32.totalorder %s16, 1
    %p126 = por %p124, %p125
    %p127 = scmp.ne.s32.totalorder %s116, %s117
    %p128 = scmp.eq.s32.totalorder %s16, 0
    %p129 = por %p127, %p128
    %p130 = scmp.ne.s32.totalorder %s116, %s117
    %p131 = scmp.eq.s32.totalorder %s17, 1
    %p132 = por %p130, %p131
    %p134 = scmp.ne.s32.totalorder %s117, %s133
    %p135 = scmp.eq.s32.totalorder %s17, 0
    %p136 = por %p134, %p135
    %s137 = ssub.s32 %s18, %s30
    %p138 = scmp.eq.s32.totalorder %s137, 0
    %s140 = sadd.s32 %s139, 1
    %s141 = scalar_select %p138, %s139, %s140
    %p144 = pneg %p138
    %p145 = scmp.eq.s32.totalorder %s11, 1
    %p146 = por %p144, %p145
    %p147 = scmp.ne.s32.totalorder %s139, %s142
    %p148 = scmp.eq.s32.totalorder %s11, 0
    %p149 = por %p147, %p148
    %p150 = scmp.ne.s32.totalorder %s139, %s142
    %p151 = scmp.eq.s32.totalorder %s16, 1
    %p152 = por %p150, %p151
    %p153 = scmp.ne.s32.totalorder %s142, %s143
    %p154 = scmp.eq.s32.totalorder %s16, 0
    %p155 = por %p153, %p154
    %p156 = scmp.ne.s32.totalorder %s142, %s143
    %p157 = scmp.eq.s32.totalorder %s17, 1
    %p158 = por %p156, %p157
    %p160 = scmp.ne.s32.totalorder %s143, %s159
    %p161 = scmp.eq.s32.totalorder %s17, 0
    %p162 = por %p160, %p161
    %p163 = scmp.le.s32.totalorder 1, %s11
    %p164 = scmp.lt.s32.totalorder %s11, 3
    %p165 = pnand %p163, %p164
    %p166 = pneg %p165
    // Predicated region
    $region9: #{output_projection.2} parent=5 // pred_check
      _
    $region10: #{output_projection.2} parent=5 // pred_check_branch
      %168 = sbr.rel (%p165) target = $region12
    $region11: #{output_projection.2} parent=5 // pred_region
      %s169 = ssub.s32 %s11, 1
      // Predicated region
      $region13: #{output_projection.2} parent=11 // pred_check
        %p170 = pneg %p75
      $region14: #{output_projection.2} parent=11 // pred_check_branch
        %172 = sbr.rel (%p170) target = $region16
      $region15: #{output_projection.2} parent=11 // pred_region
        %p173 = scmp.lt.s32.totalorder %s21, 0
        %s174 = scalar_select %p173, %s21, 0
        %s175 = smul.addr %s174, 4
        %s176 = scalar_lea.vmem %s1, %s175
      $region16: #{output_projection.2} parent=11 // pred_fallthru
        _
      // Predicated region
      $region17: #{output_projection.2} parent=11 // pred_check
        %p177 = pneg %p101
      $region18: #{output_projection.2} parent=11 // pred_check_branch
        %179 = sbr.rel (%p177) target = $region20
      $region19: #{output_projection.2} parent=11 // pred_region
        %p180 = scmp.lt.s32.totalorder %s21, 0
        %s181 = scalar_select %p180, %s21, 0
        %s182 = scalar_lea.vmem %s2, %s181
      $region20: #{output_projection.2} parent=11 // pred_fallthru
        _
    $region12: #{output_projection.2} parent=5 // pred_fallthru
      _
    %p183 = scmp.lt.s32.totalorder %s11, 2
    // Predicated region
    $region21: #{output_projection.2} parent=5 // pred_check
      %p184 = pneg %p183
    $region22: #{output_projection.2} parent=5 // pred_check_branch
      %186 = sbr.rel (%p184) target = $region24
    $region23: #{output_projection.2} parent=5 // pred_region
      // Predicated region
      $region25: #{output_projection.2} parent=23 // pred_check
        %p187 = pneg %p43
      $region26: #{output_projection.2} parent=23 // pred_check_branch
        %189 = sbr.rel (%p187) target = $region28
      $region27: #{output_projection.2} parent=23 // pred_region
        %p190 = scmp.lt.s32.totalorder %s18, 1
        %s191 = scalar_select %p190, %s18, 1
        %s192 = smul.addr %s191, 4
        %s193 = scalar_lea.vmem %s0, %s192
      $region28: #{output_projection.2} parent=23 // pred_fallthru
        _
    $region24: #{output_projection.2} parent=5 // pred_fallthru
      _
    %p194 = scmp.le.s32.totalorder 1, %s11
    %p195 = scmp.lt.s32.totalorder %s11, 3
    %p196 = pnand %p194, %p195
    %p197 = pneg %p196
    // Predicated region
    $region29: #{output_projection.2} parent=5 // pred_check
      _
    $region30: #{output_projection.2} parent=5 // pred_check_branch
      %199 = sbr.rel (%p196) target = $region32
    $region31: #{output_projection.2} parent=5 // pred_region
      %s200 = ssub.s32 %s11, 1
      %p201 = scmp.lt.s32.totalorder %s20, 1
      %s202 = scalar_select %p201, %s20, 1
      %s203 = smul.addr %s202, 4
      %s204 = scalar_lea.vmem %s0, %s203
      %p205 = pneg %p49
      %p206 = pneg %p46
      %p207 = scmp.lt.s32.totalorder %s21, 0
      %s208 = scalar_select %p207, %s21, 0
      %s209 = smul.addr %s208, 4
      %s210 = scalar_lea.vmem %s1, %s209
      %p211 = pneg %p75
      %p212 = pneg %p72
      %p213 = scmp.lt.s32.totalorder %s21, 0
      %s214 = scalar_select %p213, %s21, 0
      %s215 = scalar_lea.vmem %s2, %s214
      %p216 = pneg %p101
      %p217 = pneg %p98
      %p218 = pneg %p129
      %p219 = pneg %p126
      %p220 = scmp.lt.s32.totalorder %s20, 1
      %s221 = scalar_select %p220, %s20, 1
      %p222 = scmp.lt.s32.totalorder %s21, 0
      %s223 = scalar_select %p222, %s21, 0
      %s224 = sadd.s32 %s223, %s221
      %s225 = smul.addr %s224, 8
      %s226 = scalar_lea.vmem %s3, %s225
      %p227 = pneg %p155
      %p228 = pneg %p152
      %p229 = scmp.lt.s32.totalorder %s20, 1
      %s230 = scalar_select %p229, %s20, 1
      %s231 = smul.addr %s230, 8
      %s232 = scalar_lea.vmem %s4, %s231
      %p233 = scmp.lt.s32.totalorder %s20, 1
      %s234 = scalar_select %p233, %s20, 1
      %s235 = smul.addr %s234, 4
      %s236 = scalar_lea.vmem %s0, %s235
      %p237 = scmp.lt.s32.totalorder %s21, 0
      %s238 = scalar_select %p237, %s21, 0
      %s239 = smul.addr %s238, 4
      %s240 = scalar_lea.vmem %s1, %s239
      %p241 = scmp.lt.s32.totalorder %s21, 0
      %s242 = scalar_select %p241, %s21, 0
      %s243 = scalar_lea.vmem %s2, %s242
      %p244 = scmp.lt.s32.totalorder %s20, 1
      %s245 = scalar_select %p244, %s20, 1
      %p246 = scmp.lt.s32.totalorder %s21, 0
      %s247 = scalar_select %p246, %s21, 0
      %s248 = sadd.s32 %s247, %s245
      %s249 = smul.addr %s248, 8
      %s250 = scalar_lea.vmem %s3, %s249
      %p251 = scmp.lt.s32.totalorder %s20, 1
      %s252 = scalar_select %p251, %s20, 1
      %s253 = smul.addr %s252, 8
      %s254 = scalar_lea.vmem %s4, %s253
      %p256 = scmp.eq.s32.totalorder %s21, 0
      // Predicated region
      $region33: #{output_projection.2} parent=31 // pred_check
        %p257 = pneg %p256
      $region34: #{output_projection.2} parent=31 // pred_check_branch
        %259 = sbr.rel (%p257) target = $region36
      $region35: #{output_projection.2} parent=31 // pred_region
        %vm260 = vcmask 7168
        %261 = vst.msk [vmem:[#allocation2] sm:$0xff] %vm260, -1e+30
        %262 = vst.msk [vmem:[#allocation3] sm:$0xff] %vm260, 0.0
      $region36: #{output_projection.2} parent=31 // pred_fallthru
        _
      %v263 = vld [vmem:[%s236] sm:$0xf]
      %v264 = vld [vmem:[%s240] sm:$0xf]
      %v265 = vld [vmem:[%s240 + $0x4] sm:$0xf]
      %v266 = vld [vmem:[%s240 + $0x8] sm:$0xf]
      %v267 = vld [vmem:[%s240 + $0xc] sm:$0xf]
      %v268 = vld [vmem:[%s243] sm:$0x1]
      %v270 = vlaneseq
      %v271 = vshrl.u32 %v270, 7
      %v272 = vsub.s32 0, %v271
      %v273 = vrot.slane %v268, %v272
      %v279 = vunpack.c.l.b16 %v264
      %v280 = vunpack.c.l.b16 %v265
      %v281 = vunpack.c.l.b16 %v266
      %v282 = vunpack.c.l.b16 %v267
      %v283 = vpack.c.b16 %v280, %v279
      %v284 = vpack.c.b16 %v282, %v281
      %vm287 = vcmask 261120
      %v289 = vsel %vm287, %v263, 0
      %291 = vmatprep.subr.bf16.mxu0 0
      %292 = vmatpush1.bf16.msra.mxu0 %v283
      %293 = vmatprep.subr.bf16.mxu0 0
      %294 = vmatpush1.bf16.msra.mxu0 %v284
      %295 = vmatprep.subr.bf16.mxu0 0
      %296 = vmatpush1.bf16.msra.mxu0 0
      %297 = vmatprep.subr.bf16.mxu0 0
      %298 = vmatpush1.bf16.msra.mxu0 0
      %299 = vmatprep.subr.bf16.mxu0 0
      %300 = vmatpush1.bf16.msra.mxu0 0
      %301 = vmatprep.subr.bf16.mxu0 0
      %302 = vmatpush1.bf16.msra.mxu0 0
      %303 = vmatprep.subr.bf16.mxu0 0
      %304 = vmatpush1.bf16.msra.mxu0 0
      %305 = vmatprep.subr.bf16.mxu0 0
      %306 = vmatpush1.bf16.msra.mxu0 0
      %307 = vmatprep.subr.bf16.mxu0 0
      %308 = vmatpush1.bf16.msra.mxu0 0
      %309 = vmatprep.subr.bf16.mxu0 0
      %310 = vmatpush1.bf16.msra.mxu0 0
      %311 = vmatprep.subr.bf16.mxu0 0
      %312 = vmatpush1.bf16.msra.mxu0 0
      %313 = vmatprep.subr.bf16.mxu0 0
      %314 = vmatpush1.bf16.msra.mxu0 0
      %315 = vmatprep.subr.bf16.mxu0 0
      %316 = vmatpush1.bf16.msra.mxu0 0
      %317 = vmatprep.subr.bf16.mxu0 0
      %318 = vmatpush1.bf16.msra.mxu0 0
      %319 = vmatprep.subr.bf16.mxu0 0
      %320 = vmatpush1.bf16.msra.mxu0 0
      %321 = vmatprep.subr.bf16.mxu0 0
      %322 = vmatpush1.bf16.msra.mxu0 0
      %323 = vmatprep.mubr.bf16.mxu0 0
      %324 = vmatmul.mubr.bf16.gmra.mrb[0].mxu0 %v289
      %v325 = vpop.f32.mrb[0].mxu0
      %v326 = vadd.f32 %v273, %v325
      %v327 = vpop.f32.mrb[0].mxu0
      %v328 = vpop.f32.mrb[0].mxu0
      %v329 = vpop.f32.mrb[0].mxu0
      %330 = vdwg.mxu0
      %331 = vst [vmem:[%s250] sm:$0xff] %v326
      %v332 = vld [vmem:[#allocation2] sm:$0xff]
      %333 = vmax.xlane.f32.xlu0 %v326
      %v334 = vpop.xlane.xlu0 %333
      %v335 = vmax.f32 %v332, %v334
      %v336 = vld [vmem:[#allocation3] sm:$0xff]
      %v337 = vsub.f32 %v332, %v335
      %v338 = vmul.f32 %v337, 1.442695
      %v339 = vpow.pop %v338
      %v340 = vmul.f32 %v336, %v339
      %342 = vset.pattern.permute.xlu0 0
      %343 = vperm.xlu0 %342, %v335
      %v344 = vpop.permute.xlu0 %343
      %v346 = vsub.f32 %v326, %v344
      %v347 = vmul.f32 %v346, 1.442695
      %v348 = vpow.pop %v347
      %349 = vadd.xlane.f32.xlu0 %v348
      %v350 = vpop.xlane.xlu0 %349
      %v351 = vadd.f32 %v340, %v350
      %vm352 = vcmask 7168
      %353 = vst.msk [vmem:[#allocation3] sm:$0xff] %vm352, %v351
      %354 = vst.msk [vmem:[#allocation2] sm:$0xff] %vm352, %v335
      // Predicated region
      $region37: #{output_projection.2} parent=31 // pred_check
        %p355 = pneg %p256
      $region38: #{output_projection.2} parent=31 // pred_check_branch
        %357 = sbr.rel (%p355) target = $region40
      $region39: #{output_projection.2} parent=31 // pred_region
        %v358 = vld [vmem:[#allocation2] sm:$0xff]
        %v359 = vld [vmem:[#allocation3] sm:$0xff]
        %v360 = vlog2.pop %v359
        %v361 = vmul.f32 %v360, 0.6931472
        %v362 = vadd.f32 %v358, %v361
        %363 = vst.msk [vmem:[%s254] sm:$0xff] %vm352, %v362
      $region40: #{output_projection.2} parent=31 // pred_fallthru
        _
      %p364 = scmp.lt.s32.totalorder %s20, 1
      %s365 = scalar_select %p364, %s20, 1
      %p366 = scmp.lt.s32.totalorder %s21, 0
      %s367 = scalar_select %p366, %s21, 0
      %s368 = sadd.s32 %s367, %s365
      %s369 = smul.addr %s368, 8
      %s370 = scalar_lea.vmem %s3, %s369
      %p371 = scmp.lt.s32.totalorder %s20, 1
      %s372 = scalar_select %p371, %s20, 1
      %s373 = smul.addr %s372, 8
      %s374 = scalar_lea.vmem %s4, %s373
      // Predicated region
      $region41: #{output_projection.2} parent=31 // pred_check
        %p375 = pneg %p126
      $region42: #{output_projection.2} parent=31 // pred_check_branch
        %377 = sbr.rel (%p375) target = $region44
      $region43: #{output_projection.2} parent=31 // pred_region
        _
      $region44: #{output_projection.2} parent=31 // pred_fallthru
        _
      // Predicated region
      $region45: #{output_projection.2} parent=31 // pred_check
        %p378 = pneg %p152
      $region46: #{output_projection.2} parent=31 // pred_check_branch
        %380 = sbr.rel (%p378) target = $region48
      $region47: #{output_projection.2} parent=31 // pred_region
        _
      $region48: #{output_projection.2} parent=31 // pred_fallthru
        _
    $region32: #{output_projection.2} parent=5 // pred_fallthru
      _
    %p381 = scmp.le.s32.totalorder 2, %s11
    // Predicated region
    $region49: #{output_projection.2} parent=5 // pred_check
      %p382 = pneg %p381
    $region50: #{output_projection.2} parent=5 // pred_check_branch
      %384 = sbr.rel (%p382) target = $region52
    $region51: #{output_projection.2} parent=5 // pred_region
      %s385 = ssub.s32 %s11, 2
      // Predicated region
      $region53: #{output_projection.2} parent=51 // pred_check
        %p386 = pneg %p132
      $region54: #{output_projection.2} parent=51 // pred_check_branch
        %388 = sbr.rel (%p386) target = $region56
      $region55: #{output_projection.2} parent=51 // pred_region
        %p389 = scmp.lt.s32.totalorder %s22, 1
        %s390 = scalar_select %p389, %s22, 1
        %p391 = scmp.lt.s32.totalorder %s23, 0
        %s392 = scalar_select %p391, %s23, 0
        %s393 = sadd.s32 %s392, %s390
        %s394 = smul.addr %s393, 8
        %s395 = scalar_lea.vmem %s3, %s394
      $region56: #{output_projection.2} parent=51 // pred_fallthru
        _
      // Predicated region
      $region57: #{output_projection.2} parent=51 // pred_check
        %p396 = pneg %p158
      $region58: #{output_projection.2} parent=51 // pred_check_branch
        %398 = sbr.rel (%p396) target = $region60
      $region59: #{output_projection.2} parent=51 // pred_region
        %p399 = scmp.lt.s32.totalorder %s22, 1
        %s400 = scalar_select %p399, %s22, 1
        %s401 = smul.addr %s400, 8
        %s402 = scalar_lea.vmem %s4, %s401
      $region60: #{output_projection.2} parent=51 // pred_fallthru
        _
    $region52: #{output_projection.2} parent=5 // pred_fallthru
      _
  $region6: #{output_projection.2} parent=0 // loop_footer
    %s15 = sadd.s32 1, %s11
  $region7: #{output_projection.2} parent=0 // loop_footer_branch
    %10 = sbr.rel target = $region3
  $region8: #{output_projection.2} parent=0 // loop_exit
    _

</llo_original>
